<compile_context>
chip_gen: v6e
topology: v6e:2x2x1
jax: 0.10.0
libtpu: 0.0.40
codegen_flags: <defaults>
</compile_context>

<pallas_src>
import functools

import jax
import jax.numpy as jnp
from jax.experimental import pallas as pl
from jax.experimental.pallas import tpu as pltpu


def _round_up(x, m):
    return (x + m - 1) // m * m


def _tpu_caps():
    """(physical VMEM bytes, TensorCores per chip), with safe fallbacks."""
    phys_vmem = 128 * 1024 * 1024
    num_cores = 1
    try:
        info = pltpu.get_tpu_info()
        phys_vmem = int(getattr(info, "vmem_capacity_bytes", phys_vmem))
        for attr in ("num_cores", "num_tensorcores", "tensorcore_count", "core_count"):
            val = getattr(info, attr, None)
            if val:
                num_cores = int(val)
                break
    except Exception:
        pass
    return phys_vmem, num_cores


def _pick_block(padded_n, cap):
    """Largest multiple-of-128 divisor of padded_n that is <= cap."""
    m = padded_n // 128
    g_cap = max(1, min(m, cap // 128))
    best = 1
    for g in range(1, g_cap + 1):
        if m % g == 0:
            best = g
    return 128 * best


# ---------------------------------------------------------------------------
# EvolveGCN-O weight evolution (torch.nn.GRU cell, input = hidden = prev weight),
# hoisted out of the tiled kernel body (data-independent of x, O(T*F^3) FLOPs).
# ---------------------------------------------------------------------------
def _gru_cell(w, params):
    f = w.shape[0]
    gi = w @ params["gru_w_ih"].T + params["gru_b_ih"]      # (F, 3F), gate order r|z|n
    gh = w @ params["gru_w_hh"].T + params["gru_b_hh"]
    r = jax.nn.sigmoid(gi[:, :f] + gh[:, :f])
    z = jax.nn.sigmoid(gi[:, f:2 * f] + gh[:, f:2 * f])
    n = jnp.tanh(gi[:, 2 * f:] + r * gh[:, 2 * f:])
    return (1.0 - z) * n + z * w                            # h' = (1-z)*n + z*h


def _evolve_weights(params, num_steps):
    """W_t for t = 1..T (the GCN weight evolves once per forward call)."""
    def step(w, _):
        w_new = _gru_cell(w, params)
        return w_new, w_new
    _, w_seq = jax.lax.scan(step, params["initial_weight"], None, length=num_steps)
    return w_seq                                            # (T, F, F) f32


# ---------------------------------------------------------------------------
# Tiled A @ XW + tanh + Linear kernel (A is the only streamed operand).
# ---------------------------------------------------------------------------
def _gcn_tile_kernel(a_ref, xw_ref, wl_ref, bl_ref, o_ref, acc_ref, *, block):
    """Per grid step (t, i, k):
         acc += A[t, i-tile, k-tile] @ XW[t, k-tile]          (f32 accumulation)
       At the last k:
         out[t, 0, i-tile] = lin_w . tanh(acc) + lin_b        (lane-dense row)
    """
    k = pl.program_id(2)

    @pl.when(k == 0)
    def _():
        acc_ref[...] = jnp.zeros_like(acc_ref)

    # XW_t slab is VMEM-resident for the whole time step; slice the k-tile here.
    off = pl.multiple_of(k * block, 128)
    xw_tile = xw_ref[0, pl.ds(off, block), :]                           # (blk, F) bf16
    acc_ref[...] += jnp.dot(a_ref[0], xw_tile,
                            preferred_element_type=jnp.float32)         # (blk, F) f32

    @pl.when(k == pl.num_programs(2) - 1)
    def _():
        h = jnp.tanh(acc_ref[...])                                       # (blk, F) f32
        # Linear(F -> 1): contract the F axes of (1,F) x (blk,F) -> (1, blk);
        # lane-dense row output (nodes on the lane axis), no materialized h.T.
        row = jax.lax.dot_general(
            wl_ref[...], h,
            dimension_numbers=(((1,), (1,)), ((), ())),
            preferred_element_type=jnp.float32)                          # (1, blk)
        o_ref[...] = (row + bl_ref[...])[None]                           # (1, 1, blk)


def recurrent_evolvegcno_forward(params, x_seq, a_seq, *, block=None,
                                 matmul_dtype=jnp.bfloat16):
    """Fused T-step forward.

    x_seq: (T, N, F) node features per step.
    a_seq: (T, NP, NP) dense GCN-normalized adjacency per step; ideally already
      zero-padded to NP = round_up(N, 128) and already in `matmul_dtype` (see
      gcn_norm_dense), so this wrapper never spends an extra HBM pass casting or
      padding the dominant T*N^2 array.  A fallback pad/cast is kept for
      convenience.
    Returns (T, N, 1); out[t] equals the PyTorch module applied at step t (the
    GCN weight evolving once per call), with all steps fused into one pallas_call.
    """
    T, N, F = x_seq.shape
    np_ = a_seq.shape[-1]
    assert a_seq.shape == (T, np_, np_) and np_ >= N

    # Fallback only — the fast path is a producer-padded / producer-cast A.
    if np_ % 128 != 0:
        pad = _round_up(np_, 128) - np_
        a_seq = jnp.pad(a_seq, ((0, 0), (0, pad), (0, pad)))
        np_ += pad
    if a_seq.dtype != matmul_dtype:
        a_seq = a_seq.astype(matmul_dtype)

    phys_vmem, num_cores = _tpu_caps()
    # Per-generation caps: A-tile up to 4096 (128 MiB VMEM: v5e/v6e), 2048 (64 MiB: v7x).
    block_cap = 4096 if phys_vmem >= (96 << 20) else 2048
    vmem_limit = int(min(96 << 20, (phys_vmem * 3) // 4))
    if block is None:
        block = _pick_block(np_, block_cap)
    assert block % 128 == 0 and np_ % block == 0

    # Hoisted out of the tiled body: GRU weight evolution (O(T*F^3)) and the
    # XW = X_t @ W_t rider matmul (O(T*N*F^2)), both tiny next to the A stream.
    w_seq = _evolve_weights(params, T)                                   # (T, F, F) f32
    xw = jnp.einsum("tnf,tfg->tng", x_seq.astype(jnp.float32), w_seq)    # f32
    xw = xw.astype(matmul_dtype)
    if np_ != N:
        xw = jnp.pad(xw, ((0, 0), (0, np_ - N), (0, 0)))                 # small (T,NP,F)

    wl = params["lin_w"].astype(jnp.float32)                             # (1, F)
    bl = params["lin_b"].reshape(1, 1).astype(jnp.float32)               # (1, 1)

    grid = (T, np_ // block, np_ // block)
    kernel = functools.partial(_gcn_tile_kernel, block=block)

    def run(dim_sems):
        return pl.pallas_call(
            kernel,
            out_shape=jax.ShapeDtypeStruct((T, 1, np_), jnp.float32),
            grid_spec=pltpu.PrefetchScalarGridSpec(
                num_scalar_prefetch=0,
                grid=grid,
                in_specs=[
                    pl.BlockSpec((1, block, block), lambda t, i, k: (t, i, k)),  # A tile (streamed)
                    pl.BlockSpec((1, np_, F), lambda t, i, k: (t, 0, 0)),        # XW_t slab (resident per t)
                    pl.BlockSpec((1, F), lambda t, i, k: (0, 0)),                # lin weight
                    pl.BlockSpec((1, 1), lambda t, i, k: (0, 0)),                # lin bias
                ],
                out_specs=pl.BlockSpec((1, 1, block), lambda t, i, k: (t, 0, i)),
                scratch_shapes=[pltpu.VMEM((block, F), jnp.float32)],
            ),
            compiler_params=pltpu.CompilerParams(
                dimension_semantics=dim_sems,
                vmem_limit_bytes=vmem_limit,
            ),
        )(a_seq, xw, wl, bl)

    if num_cores > 1:
        # v7x: shard the time axis across the 2 TensorCores; fall back to the
        # single-core-validated semantics if CORE_PARALLEL is rejected.
        try:
            out = run((pltpu.CORE_PARALLEL, pltpu.PARALLEL, pltpu.ARBITRARY))
        except Exception:
            out = run(("parallel", "parallel", "arbitrary"))
    else:
        out = run(("parallel", "parallel", "arbitrary"))

    return out[:, 0, :N][..., None]                                       # (T, N, 1)


# ---------------------------------------------------------------------------
# JAX glue: dense GCN normalization (with fused pad + cast), init, reference.
# ---------------------------------------------------------------------------
def gcn_norm_dense(edge_index, edge_weight, num_nodes, *, padded_nodes=None,
                   out_dtype=jnp.float32):
    """Dense equivalent of PyG gcn_norm (add_remaining_self_loops, fill=1.0):
    a[i, j] = deg^-1/2[i] * w(j->i) * deg^-1/2[j].

    If padded_nodes / out_dtype are given, the padded low-precision adjacency is
    produced directly here (cast & pad fused into the producer), so the forward
    wrapper never re-touches the T*N^2 array.  Padded rows/cols stay exactly zero.
    """
    # TODO(synk): sparse scatter-based message passing has no clean Pallas
    # equivalent at this size; the normalized adjacency is densified in JAX glue.
    n_out = num_nodes if padded_nodes is None else padded_nodes
    row, col = edge_index[0], edge_index[1]                   # source, target
    loop = jnp.arange(num_nodes, dtype=edge_index.dtype)
    row = jnp.concatenate([row, loop])
    col = jnp.concatenate([col, loop])
    w = jnp.concatenate(
        [edge_weight, jnp.ones((num_nodes,), dtype=edge_weight.dtype)])
    a = jnp.zeros((n_out, n_out), dtype=jnp.float32)
    a = a.at[col, row].add(w.astype(jnp.float32))             # aggregate at target
    deg = jnp.sum(a, axis=1)
    dinv = jnp.where(deg > 0.0, jax.lax.rsqrt(deg), 0.0)
    return (dinv[:, None] * a * dinv[None, :]).astype(out_dtype)


def init_params(key, node_features):
    """Deterministic init matching the PyTorch module's shapes/distributions."""
    F = node_features
    ks = jax.random.split(key, 7)
    stdv = 1.0 / float(F) ** 0.5
    u = lambda k, shape: jax.random.uniform(
        k, shape, dtype=jnp.float32, minval=-stdv, maxval=stdv)
    return {
        "initial_weight": u(ks[0], (F, F)),                   # EvolveGCNO initial_weight
        "gru_w_ih": u(ks[1], (3 * F, F)),                     # torch.nn.GRU(F, F)
        "gru_w_hh": u(ks[2], (3 * F, F)),
        "gru_b_ih": u(ks[3], (3 * F,)),
        "gru_b_hh": u(ks[4], (3 * F,)),
        "lin_w": u(ks[5], (1, F)),                            # torch.nn.Linear(F, 1)
        "lin_b": u(ks[6], (1,)),
    }


def reference_forward(params, x_seq, a_seq):
    """Pure-JAX f32 reference == PyTorch module applied sequentially per step."""
    w_seq = _evolve_weights(params, x_seq.shape[0])
    xw = jnp.einsum("tnf,tfg->tng", x_seq, w_seq)
    h = jnp.tanh(jnp.einsum("tmn,tnf->tmf", a_seq, xw))
    return jnp.einsum("tnf,of->tno", h, params["lin_w"]) + params["lin_b"]


if __name__ == "__main__":
    key = jax.random.PRNGKey(0)
    node_features = 32
    num_nodes = 16
    num_edges = 48
    num_steps = 4

    k_par, k_seq = jax.random.split(key)
    params = init_params(k_par, node_features)

    padded_nodes = _round_up(num_nodes, 128)

    xs, adjs_lowp, adjs_f32 = [], [], []
    step_keys = jax.random.split(k_seq, num_steps)
    for t in range(num_steps):
        k_x, k_src, k_off, k_w = jax.random.split(step_keys[t], 4)
        x = jax.random.normal(k_x, (num_nodes, node_features), dtype=jnp.float32)
        # random directed edges without self-loops per step
        src = jax.random.randint(k_src, (num_edges,), 0, num_nodes, dtype=jnp.int32)
        off = jax.random.randint(k_off, (num_edges,), 1, num_nodes, dtype=jnp.int32)
        dst = (src + off) % num_nodes
        edge_index = jnp.stack([src, dst]).astype(jnp.int32)
        edge_weight = jax.random.uniform(k_w, (num_edges,), dtype=jnp.float32,
                                         minval=0.5, maxval=1.5)
        xs.append(x)
        # Kernel input: padded bf16 adjacency straight from the producer
        # (no extra cast/pad HBM pass in the forward wrapper).
        adjs_lowp.append(gcn_norm_dense(edge_index, edge_weight, num_nodes,
                                        padded_nodes=padded_nodes,
                                        out_dtype=jnp.bfloat16))
        # f32 unpadded copy only for the pure-JAX reference check.
        adjs_f32.append(gcn_norm_dense(edge_index, edge_weight, num_nodes))

    x_seq = jnp.stack(xs)            # (T, N, F)
    a_seq = jnp.stack(adjs_lowp)     # (T, NP, NP) bf16, zero-padded
    a_ref = jnp.stack(adjs_f32)      # (T, N, N) f32

    out = recurrent_evolvegcno_forward(params, x_seq, a_seq)
    out = jax.block_until_ready(out)

    assert out.shape == (num_steps, num_nodes, 1) and out.dtype == jnp.float32
    assert bool(jnp.all(jnp.isfinite(out)))

    # bf16 MXU operands with f32 accumulation -> small drift vs the f32 reference.
    ref = reference_forward(params, x_seq, a_ref)
    max_err = float(jnp.max(jnp.abs(out - ref)))
    assert max_err < 1e-1, f"max abs err {max_err}"

    print("KERNEL_OK")
</pallas_src>

<mosaic_0001>
module attributes {stable_mosaic.version = 11 : i64} {
  func.func @_gcn_tile_kernel(%arg0: i32, %arg1: i32, %arg2: i32, %arg3: memref<1x128x128xbf16, #tpu.memory_space<vmem>>, %arg4: memref<1x128x32xbf16, #tpu.memory_space<vmem>>, %arg5: memref<1x32xf32, #tpu.memory_space<vmem>>, %arg6: memref<1x1xf32, #tpu.memory_space<vmem>>, %arg7: memref<1x1x128xf32, #tpu.memory_space<vmem>>, %arg8: memref<128x32xf32, #tpu.memory_space<vmem>>) attributes {dimension_semantics = [#tpu.dimension_semantics<parallel>, #tpu.dimension_semantics<parallel>, #tpu.dimension_semantics<arbitrary>], iteration_bounds = array<i64: 4, 1, 1>, scalar_prefetch = 0 : i64, scratch_operands = 1 : i64, tpu.core_type = #tpu.core_type<tc>, window_params = [{transform_indices = @transform_0, window_bounds = array<i64: 1, 128, 128>}, {transform_indices = @transform_1, window_bounds = array<i64: 1, 128, 32>}, {pipeline_mode = #tpu.pipeline_mode<synchronous>, transform_indices = @transform_2, window_bounds = array<i64: 1, 32>}, {pipeline_mode = #tpu.pipeline_mode<synchronous>, transform_indices = @transform_3, window_bounds = array<i64: 1, 1>}, {transform_indices = @transform_4, window_bounds = array<i64: 1, 1, 128>}]} {
    %c0_i32 = arith.constant 0 : i32
    %0 = arith.cmpi eq, %arg2, %c0_i32 : i32
    %1 = arith.extui %0 : i1 to i32
    %c0_i32_0 = arith.constant 0 : i32
    %2 = arith.cmpi ne, %1, %c0_i32_0 : i32
    scf.if %2 {
      %cst_11 = arith.constant 0.000000e+00 : f32
      %17 = vector.broadcast %cst_11 : f32 to vector<128x32xf32>
      %c0_12 = arith.constant 0 : index
      %c0_13 = arith.constant 0 : index
      %18 = vector.load %arg8[%c0_12, %c0_13] : memref<128x32xf32, #tpu.memory_space<vmem>>, vector<128x32xf32>
      tpu.vector_store %arg8[%c0_12, %c0_13], %17 {strides = array<i32>} : memref<128x32xf32, #tpu.memory_space<vmem>>, vector<128x32xf32>,
    } else {
    }
    %c128_i32 = arith.constant 128 : i32
    %3 = arith.muli %arg2, %c128_i32 : i32
    %4 = tpu.assume_multiple %3, 128 : i32
    %c0 = arith.constant 0 : index
    %5 = arith.index_cast %4 : i32 to index
    %c0_1 = arith.constant 0 : index
    %6 = vector.load %arg4[%c0, %5, %c0_1] : memref<1x128x32xbf16, #tpu.memory_space<vmem>>, vector<1x128x32xbf16>
    %7 = vector.shape_cast %6 : vector<1x128x32xbf16> to vector<128x32xbf16>
    %c0_2 = arith.constant 0 : index
    %c0_3 = arith.constant 0 : index
    %8 = vector.load %arg8[%c0_2, %c0_3] : memref<128x32xf32, #tpu.memory_space<vmem>>, vector<128x32xf32>
    %c0_4 = arith.constant 0 : index
    %c0_5 = arith.constant 0 : index
    %c0_6 = arith.constant 0 : index
    %9 = vector.load %arg3[%c0_4, %c0_5, %c0_6] : memref<1x128x128xbf16, #tpu.memory_space<vmem>>, vector<1x128x128xbf16>
    %10 = vector.shape_cast %9 : vector<1x128x128xbf16> to vector<128x128xbf16>
    %cst = arith.constant dense<0.000000e+00> : vector<128x32xf32>
    %11 = tpu.matmul %10, %7, %cst {dimension_numbers = #tpu.dot_dimension_numbers<[1], [0], [0], [1], [0, 0, 1, 1], [], []>} : vector<128x128xbf16>, vector<128x32xbf16>, vector<128x32xf32> -> vector<128x32xf32>
    %12 = arith.addf %8, %11 : vector<128x32xf32>
    %c0_7 = arith.constant 0 : index
    %c0_8 = arith.constant 0 : index
    %13 = vector.load %arg8[%c0_7, %c0_8] : memref<128x32xf32, #tpu.memory_space<vmem>>, vector<128x32xf32>
    tpu.vector_store %arg8[%c0_7, %c0_8], %12 {strides = array<i32>} : memref<128x32xf32, #tpu.memory_space<vmem>>, vector<128x32xf32>,
    %c0_i32_9 = arith.constant 0 : i32
    %14 = arith.cmpi eq, %arg2, %c0_i32_9 : i32
    %15 = arith.extui %14 : i1 to i32
    %c0_i32_10 = arith.constant 0 : i32
    %16 = arith.cmpi ne, %15, %c0_i32_10 : i32
    scf.if %16 {
      %c0_11 = arith.constant 0 : index
      %c0_12 = arith.constant 0 : index
      %17 = vector.load %arg8[%c0_11, %c0_12] : memref<128x32xf32, #tpu.memory_space<vmem>>, vector<128x32xf32>
      %18 = math.tanh %17 : vector<128x32xf32>
      %c0_13 = arith.constant 0 : index
      %c0_14 = arith.constant 0 : index
      %19 = vector.load %arg5[%c0_13, %c0_14] : memref<1x32xf32, #tpu.memory_space<vmem>>, vector<1x32xf32>
      %cst_15 = arith.constant dense<0.000000e+00> : vector<1x128xf32>
      %20 = tpu.matmul %19, %18, %cst_15 {dimension_numbers = #tpu.dot_dimension_numbers<[1], [1], [0], [0], [0, 0, 1, 0], [], []>} : vector<1x32xf32>, vector<128x32xf32>, vector<1x128xf32> -> vector<1x128xf32>
      %c0_16 = arith.constant 0 : index
      %c0_17 = arith.constant 0 : index
      %21 = vector.load %arg6[%c0_16, %c0_17] : memref<1x1xf32, #tpu.memory_space<vmem>>, vector<1x1xf32>
      %22 = vector.broadcast %21 : vector<1x1xf32> to vector<1x128xf32>
      %23 = arith.addf %20, %22 : vector<1x128xf32>
      %24 = vector.shape_cast %23 : vector<1x128xf32> to vector<1x1x128xf32>
      %c0_18 = arith.constant 0 : index
      %c0_19 = arith.constant 0 : index
      %c0_20 = arith.constant 0 : index
      %25 = vector.load %arg7[%c0_18, %c0_19, %c0_20] : memref<1x1x128xf32, #tpu.memory_space<vmem>>, vector<1x1x128xf32>
      tpu.vector_store %arg7[%c0_18, %c0_19, %c0_20], %24 {strides = array<i32>} : memref<1x1x128xf32, #tpu.memory_space<vmem>>, vector<1x1x128xf32>,
    } else {
    }
    return
  }
  func.func @transform_0(%arg0: i32, %arg1: i32, %arg2: i32) -> (i32, i32, i32) {
    %c0_i32 = arith.constant 0 : i32
    return %arg0, %arg1, %arg2 : i32, i32, i32
  }
  func.func @transform_1(%arg0: i32, %arg1: i32, %arg2: i32) -> (i32, i32, i32) {
    %c0_i32 = arith.constant 0 : i32
    %c0_i32_0 = arith.constant 0 : i32
    %c0_i32_1 = arith.constant 0 : i32
    return %arg0, %c0_i32, %c0_i32_0 : i32, i32, i32
  }
  func.func @transform_2(%arg0: i32, %arg1: i32, %arg2: i32) -> (i32, i32) {
    %c0_i32 = arith.constant 0 : i32
    %c0_i32_0 = arith.constant 0 : i32
    %c0_i32_1 = arith.constant 0 : i32
    return %c0_i32, %c0_i32_0 : i32, i32
  }
  func.func @transform_3(%arg0: i32, %arg1: i32, %arg2: i32) -> (i32, i32) {
    %c0_i32 = arith.constant 0 : i32
    %c0_i32_0 = arith.constant 0 : i32
    %c0_i32_1 = arith.constant 0 : i32
    return %c0_i32, %c0_i32_0 : i32, i32
  }
  func.func @transform_4(%arg0: i32, %arg1: i32, %arg2: i32) -> (i32, i32, i32) {
    %c0_i32 = arith.constant 0 : i32
    %c0_i32_0 = arith.constant 0 : i32
    return %arg0, %c0_i32, %arg1 : i32, i32, i32
  }
}

</mosaic_0001>

<llo_original>
// kernel: tpu_custom_call.1
$region0: #{tpu_custom_call.1}
  #allocation0 [shape = 'u32[]', space=smem, size = 0x4, offset = 0x4, fixed_abs, tag = 'smem constant byte address 0x4 - core index']
  #allocation1 [shape = 'u32[144,128]{1,0:T(1,128)}', space=vmem, size = 0x12000, scoped, tag = 'internal scratch']
  #allocation2 [shape = 'f32[128,32]{1,0:T(8,128)}', space=vmem, size = 0x10000, scoped, tag = 'scratch operand']
  #allocation3 [shape = 'f32[1,1]{1,0:T(1,128)S(1)}', space=vmem, size = 0x200, scoped, tag = 'scoped memory for tpu_custom_call.1']
  %s0 = inlined_call_operand.vmem [shape: bf16[4,128,128], index: 0, kind: input, shape index: {}]
  %s1 = inlined_call_operand.vmem [shape: bf16[4,128,32], index: 1, kind: input, shape index: {}]
  %s2 = inlined_call_operand.vmem [shape: f32[1,32], index: 2, kind: input, shape index: {}]
  %s3 = inlined_call_operand.<no memory space> [shape: f32[1,1], index: 3, kind: input, shape index: {}]
  %s4 = inlined_call_operand.hbm [shape: f32[4,1,128], index: 4, kind: output, shape index: {}]
  %s5 = sld [smem:[#allocation0]]
  $region57: #{tpu_custom_call.1} parent=0
    _
  %s7 = ssub.s32 1, %s5
  %s8 = scalar_select 0, %s7, %s5
  %v9 = vstv %s3
  %10 = vst [vmem:[#allocation3] sm:$0x1] %v9
  $region1: #{tpu_custom_call.1} parent=0
    #allocation4 [shape = 'u8[1024]{0}', space=vmem, size = 0x400, scoped, tag = 'output window, operand 0']
    #allocation5 [shape = 's32[2]{0}', space=sflag, size = 0x8, scoped, tag = 'scoped memory for tpu_custom_call.1']
    %11 = vsyncpa [#allocation5], 0
    %s12 = scalar_lea.sflag [#allocation5], 1
    %13 = vsyncpa %s12, 0
    loop: start=0, step=1, limit=6
    $region2: #{tpu_custom_call.1} parent=1 // loop_pre_header
      _
    $region3: #{tpu_custom_call.1} parent=1 // loop_header
      %s15 = sphi 0, %s19
      %p16 = scmp.ge.s32.totalorder %s15, 6
      %s22 = sphi 0, %s41
      %s23 = sphi 0, %s37
      %s24 = sphi 0, %s33
      %s25 = sphi 0, %s22
      %s26 = sphi 0, %s23
      %s27 = sphi 0, %s24
      %s28 = sphi 0, %s25
      %s29 = sphi 0, %s26
      %s30 = sphi 0, %s27
      %s48 = sphi 0, %s50
      %s51 = sphi 0, %s48
      %s52 = sphi 0, %s51
      %s68 = sphi 0, %s52
      %s74 = sphi 0, %s76
      %s77 = sphi 0, %s74
      %s78 = sphi 0, %s77
      %s94 = sphi 0, %s78
      %s98 = sphi 0, %s98
      %s100 = sphi 0, %s98
      %s101 = sphi 0, %s100
      %s115 = sphi 0, %s101
      %s119 = sphi 0, %s119
      %s121 = sphi 0, %s119
      %s122 = sphi 0, %s121
      %s136 = sphi 0, %s122
      %s144 = sphi 0, %s146
      %s147 = sphi 0, %s144
      %s148 = sphi 0, %s147
      %s164 = sphi 0, %s148
    $region4: #{tpu_custom_call.1} parent=1 // loop_header_branch
      %18 = sbr.rel (%p16) target = $region8
    $region5: #{tpu_custom_call.1} parent=1 // loop_body
      %s20 = ssub.s32 %s15, 1
      %s21 = ssub.s32 %s15, 2
      %s31 = sadd.s32 1, %s24
      %p32 = scmp.ge.s32.totalorder %s31, 1
      %s33 = scalar_select %p32, 0, %s31
      %s34 = sadd.s32 1, %s23
      %s35 = scalar_select %p32, %s34, %s23
      %p36 = scmp.ge.s32.totalorder %s35, 1
      %s37 = scalar_select %p36, 0, %s35
      %s38 = sadd.s32 1, %s22
      %s39 = scalar_select %p36, %s38, %s22
      %p40 = scmp.ge.s32.totalorder %s39, 4
      %s41 = scalar_select %p40, 0, %s39
      %s42 = ssub.s32 %s22, %s41
      %s43 = ssub.s32 %s23, %s37
      %s44 = sor.u32 %s42, %s43
      %s45 = ssub.s32 %s24, %s33
      %s46 = sor.u32 %s44, %s45
      %p47 = scmp.eq.s32.totalorder %s46, 0
      %s49 = sadd.s32 %s48, 1
      %s50 = scalar_select %p47, %s48, %s49
      %p53 = pneg %p47
      %p54 = scmp.eq.s32.totalorder %s15, 3
      %p55 = por %p53, %p54
      %p56 = scmp.ne.s32.totalorder %s48, %s51
      %p57 = scmp.eq.s32.totalorder %s15, 0
      %p58 = por %p56, %p57
      %p59 = scmp.ne.s32.totalorder %s48, %s51
      %p60 = scmp.eq.s32.totalorder %s20, 3
      %p61 = por %p59, %p60
      %p62 = scmp.ne.s32.totalorder %s51, %s52
      %p63 = scmp.eq.s32.totalorder %s20, 0
      %p64 = por %p62, %p63
      %p65 = scmp.ne.s32.totalorder %s51, %s52
      %p66 = scmp.eq.s32.totalorder %s21, 3
      %p67 = por %p65, %p66
      %p69 = scmp.ne.s32.totalorder %s52, %s68
      %p70 = scmp.eq.s32.totalorder %s21, 0
      %p71 = por %p69, %p70
      %s72 = ssub.s32 %s22, %s41
      %p73 = scmp.eq.s32.totalorder %s72, 0
      %s75 = sadd.s32 %s74, 1
      %s76 = scalar_select %p73, %s74, %s75
      %p79 = pneg %p73
      %p80 = scmp.eq.s32.totalorder %s15, 3
      %p81 = por %p79, %p80
      %p82 = scmp.ne.s32.totalorder %s74, %s77
      %p83 = scmp.eq.s32.totalorder %s15, 0
      %p84 = por %p82, %p83
      %p85 = scmp.ne.s32.totalorder %s74, %s77
      %p86 = scmp.eq.s32.totalorder %s20, 3
      %p87 = por %p85, %p86
      %p88 = scmp.ne.s32.totalorder %s77, %s78
      %p89 = scmp.eq.s32.totalorder %s20, 0
      %p90 = por %p88, %p89
      %p91 = scmp.ne.s32.totalorder %s77, %s78
      %p92 = scmp.eq.s32.totalorder %s21, 3
      %p93 = por %p91, %p92
      %p95 = scmp.ne.s32.totalorder %s78, %s94
      %p96 = scmp.eq.s32.totalorder %s21, 0
      %p97 = por %p95, %p96
      %s99 = sadd.s32 %s98, 1
      %p102 = scmp.eq.s32.totalorder %s15, 3
      %p103 = scmp.ne.s32.totalorder %s98, %s100
      %p104 = scmp.eq.s32.totalorder %s15, 0
      %p105 = por %p103, %p104
      %p106 = scmp.ne.s32.totalorder %s98, %s100
      %p107 = scmp.eq.s32.totalorder %s20, 3
      %p108 = por %p106, %p107
      %p109 = scmp.ne.s32.totalorder %s100, %s101
      %p110 = scmp.eq.s32.totalorder %s20, 0
      %p111 = por %p109, %p110
      %p112 = scmp.ne.s32.totalorder %s100, %s101
      %p113 = scmp.eq.s32.totalorder %s21, 3
      %p114 = por %p112, %p113
      %p116 = scmp.ne.s32.totalorder %s101, %s115
      %p117 = scmp.eq.s32.totalorder %s21, 0
      %p118 = por %p116, %p117
      %s120 = sadd.s32 %s119, 1
      %p123 = scmp.eq.s32.totalorder %s15, 3
      %p124 = scmp.ne.s32.totalorder %s119, %s121
      %p125 = scmp.eq.s32.totalorder %s15, 0
      %p126 = por %p124, %p125
      %p127 = scmp.ne.s32.totalorder %s119, %s121
      %p128 = scmp.eq.s32.totalorder %s20, 3
      %p129 = por %p127, %p128
      %p130 = scmp.ne.s32.totalorder %s121, %s122
      %p131 = scmp.eq.s32.totalorder %s20, 0
      %p132 = por %p130, %p131
      %p133 = scmp.ne.s32.totalorder %s121, %s122
      %p134 = scmp.eq.s32.totalorder %s21, 3
      %p135 = por %p133, %p134
      %p137 = scmp.ne.s32.totalorder %s122, %s136
      %p138 = scmp.eq.s32.totalorder %s21, 0
      %p139 = por %p137, %p138
      %s140 = ssub.s32 %s22, %s41
      %s141 = ssub.s32 %s23, %s37
      %s142 = sor.u32 %s140, %s141
      %p143 = scmp.eq.s32.totalorder %s142, 0
      %s145 = sadd.s32 %s144, 1
      %s146 = scalar_select %p143, %s144, %s145
      %p149 = pneg %p143
      %p150 = scmp.eq.s32.totalorder %s15, 3
      %p151 = por %p149, %p150
      %p152 = scmp.ne.s32.totalorder %s144, %s147
      %p153 = scmp.eq.s32.totalorder %s15, 0
      %p154 = por %p152, %p153
      %p155 = scmp.ne.s32.totalorder %s144, %s147
      %p156 = scmp.eq.s32.totalorder %s20, 3
      %p157 = por %p155, %p156
      %p158 = scmp.ne.s32.totalorder %s147, %s148
      %p159 = scmp.eq.s32.totalorder %s20, 0
      %p160 = por %p158, %p159
      %p161 = scmp.ne.s32.totalorder %s147, %s148
      %p162 = scmp.eq.s32.totalorder %s21, 3
      %p163 = por %p161, %p162
      %p165 = scmp.ne.s32.totalorder %s148, %s164
      %p166 = scmp.eq.s32.totalorder %s21, 0
      %p167 = por %p165, %p166
      %p168 = scmp.le.s32.totalorder 1, %s15
      %p169 = scmp.lt.s32.totalorder %s15, 5
      %p170 = pnand %p168, %p169
      %p171 = pneg %p170
      // Predicated region
      $region9: #{tpu_custom_call.1} parent=5 // pred_check
        _
      $region10: #{tpu_custom_call.1} parent=5 // pred_check_branch
        %173 = sbr.rel (%p170) target = $region12
      $region11: #{tpu_custom_call.1} parent=5 // pred_region
        %s174 = ssub.s32 %s15, 1
        // Predicated region
        $region13: #{tpu_custom_call.1} parent=11 // pred_check
          %p175 = pneg %p111
        $region14: #{tpu_custom_call.1} parent=11 // pred_check_branch
          %177 = sbr.rel (%p175) target = $region16
        $region15: #{tpu_custom_call.1} parent=11 // pred_region
          _
        $region16: #{tpu_custom_call.1} parent=11 // pred_fallthru
          _
        // Predicated region
        $region17: #{tpu_custom_call.1} parent=11 // pred_check
          %p178 = pneg %p132
        $region18: #{tpu_custom_call.1} parent=11 // pred_check_branch
          %180 = sbr.rel (%p178) target = $region20
        $region19: #{tpu_custom_call.1} parent=11 // pred_region
          _
        $region20: #{tpu_custom_call.1} parent=11 // pred_fallthru
          _
      $region12: #{tpu_custom_call.1} parent=5 // pred_fallthru
        _
      %p181 = scmp.lt.s32.totalorder %s15, 4
      // Predicated region
      $region21: #{tpu_custom_call.1} parent=5 // pred_check
        %p182 = pneg %p181
      $region22: #{tpu_custom_call.1} parent=5 // pred_check_branch
        %184 = sbr.rel (%p182) target = $region24
      $region23: #{tpu_custom_call.1} parent=5 // pred_region
        // Predicated region
        $region25: #{tpu_custom_call.1} parent=23 // pred_check
          %p185 = pneg %p58
        $region26: #{tpu_custom_call.1} parent=23 // pred_check_branch
          %187 = sbr.rel (%p185) target = $region28
        $region27: #{tpu_custom_call.1} parent=23 // pred_region
          %s188 = smul.u32 16, %s23
          %p189 = scmp.lt.s32.totalorder %s22, 3
          %s190 = scalar_select %p189, %s22, 3
          %p191 = scmp.lt.s32.totalorder %s188, 15
          %s192 = scalar_select %p191, %s188, 15
          %p193 = scmp.lt.s32.totalorder %s24, 0
          %s194 = scalar_select %p193, %s24, 0
          %s195 = sadd.s32 %s194, %s192
          %s196 = smul.addr %s190, 16
          %s197 = sadd.s32 %s195, %s196
          %s198 = smul.addr %s197, 4
          %s199 = scalar_lea.vmem %s0, %s198
          %s200 = smul.u32 16, %s23
        $region28: #{tpu_custom_call.1} parent=23 // pred_fallthru
          _
        // Predicated region
        $region29: #{tpu_custom_call.1} parent=23 // pred_check
          %p201 = pneg %p84
        $region30: #{tpu_custom_call.1} parent=23 // pred_check_branch
          %203 = sbr.rel (%p201) target = $region32
        $region31: #{tpu_custom_call.1} parent=23 // pred_region
          %p204 = scmp.lt.s32.totalorder %s22, 3
          %s205 = scalar_select %p204, %s22, 3
          %s206 = smul.addr %s205, 16
          %s207 = smul.addr %s206, 4
          %s208 = scalar_lea.vmem %s1, %s207
        $region32: #{tpu_custom_call.1} parent=23 // pred_fallthru
          _
      $region24: #{tpu_custom_call.1} parent=5 // pred_fallthru
        _
      %p209 = scmp.le.s32.totalorder 1, %s15
      %p210 = scmp.lt.s32.totalorder %s15, 5
      %p211 = pnand %p209, %p210
      %p212 = pneg %p211
      // Predicated region
      $region33: #{tpu_custom_call.1} parent=5 // pred_check
        _
      $region34: #{tpu_custom_call.1} parent=5 // pred_check_branch
        %214 = sbr.rel (%p211) target = $region36
      $region35: #{tpu_custom_call.1} parent=5 // pred_region
        %s215 = ssub.s32 %s15, 1
        %s216 = smul.u32 16, %s26
        %p217 = scmp.lt.s32.totalorder %s25, 3
        %s218 = scalar_select %p217, %s25, 3
        %p219 = scmp.lt.s32.totalorder %s216, 15
        %s220 = scalar_select %p219, %s216, 15
        %p221 = scmp.lt.s32.totalorder %s27, 0
        %s222 = scalar_select %p221, %s27, 0
        %s223 = sadd.s32 %s222, %s220
        %s224 = smul.addr %s218, 16
        %s225 = sadd.s32 %s223, %s224
        %s226 = smul.addr %s225, 4
        %s227 = scalar_lea.vmem %s0, %s226
        %p228 = pneg %p64
        %p229 = pneg %p61
        %p230 = scmp.lt.s32.totalorder %s25, 3
        %s231 = scalar_select %p230, %s25, 3
        %s232 = smul.addr %s231, 16
        %s233 = smul.addr %s232, 4
        %s234 = scalar_lea.vmem %s1, %s233
        %p235 = pneg %p90
        %p236 = pneg %p87
        %p237 = pneg %p111
        %p238 = pneg %p108
        %p239 = pneg %p132
        %p240 = pneg %p129
        %p241 = pneg %p160
        %p242 = pneg %p157
        %s243 = sand.u32 %s147, 1
        %s244 = scalar_lea.sflag [#allocation5], %s243
        %s245 = sand.u32 %s147, 1
        %s246 = scalar_lea.vmem [#allocation4], %s245
        %s247 = smul.u32 16, %s26
        %p248 = scmp.lt.s32.totalorder %s25, 3
        %s249 = scalar_select %p248, %s25, 3
        %p250 = scmp.lt.s32.totalorder %s247, 15
        %s251 = scalar_select %p250, %s247, 15
        %p252 = scmp.lt.s32.totalorder %s27, 0
        %s253 = scalar_select %p252, %s27, 0
        %s254 = sadd.s32 %s253, %s251
        %s255 = smul.addr %s249, 16
        %s256 = sadd.s32 %s254, %s255
        %s257 = smul.addr %s256, 4
        %s258 = scalar_lea.vmem %s0, %s257
        %s259 = smul.u32 16, %s26
        %p260 = scmp.lt.s32.totalorder %s25, 3
        %s261 = scalar_select %p260, %s25, 3
        %s262 = smul.addr %s261, 16
        %s263 = smul.addr %s262, 4
        %s264 = scalar_lea.vmem %s1, %s263
        %p266 = scmp.eq.s32.totalorder %s27, 0
        // Predicated region
        $region37: #{tpu_custom_call.1} parent=35 // pred_check
          %p267 = pneg %p266
        $region38: #{tpu_custom_call.1} parent=35 // pred_check_branch
          %269 = sbr.rel (%p267) target = $region40
        $region39: #{tpu_custom_call.1} parent=35 // pred_region
          %vm270 = vcmask 261120
          %271 = vst.msk [vmem:[#allocation2] sm:$0xff] %vm270, 0.0
          %272 = vst.msk [vmem:[#allocation2 + $0x8] sm:$0xff] %vm270, 0.0
          %273 = vst.msk [vmem:[#allocation2 + $0x10] sm:$0xff] %vm270, 0.0
          %274 = vst.msk [vmem:[#allocation2 + $0x18] sm:$0xff] %vm270, 0.0
          %275 = vst.msk [vmem:[#allocation2 + $0x20] sm:$0xff] %vm270, 0.0
          %276 = vst.msk [vmem:[#allocation2 + $0x28] sm:$0xff] %vm270, 0.0
          %277 = vst.msk [vmem:[#allocation2 + $0x30] sm:$0xff] %vm270, 0.0
          %278 = vst.msk [vmem:[#allocation2 + $0x38] sm:$0xff] %vm270, 0.0
          %279 = vst.msk [vmem:[#allocation2 + $0x40] sm:$0xff] %vm270, 0.0
          %280 = vst.msk [vmem:[#allocation2 + $0x48] sm:$0xff] %vm270, 0.0
          %281 = vst.msk [vmem:[#allocation2 + $0x50] sm:$0xff] %vm270, 0.0
          %282 = vst.msk [vmem:[#allocation2 + $0x58] sm:$0xff] %vm270, 0.0
          %283 = vst.msk [vmem:[#allocation2 + $0x60] sm:$0xff] %vm270, 0.0
          %284 = vst.msk [vmem:[#allocation2 + $0x68] sm:$0xff] %vm270, 0.0
          %285 = vst.msk [vmem:[#allocation2 + $0x70] sm:$0xff] %vm270, 0.0
          %286 = vst.msk [vmem:[#allocation2 + $0x78] sm:$0xff] %vm270, 0.0
        $region40: #{tpu_custom_call.1} parent=35 // pred_fallthru
          _
        %s287 = smul.u32 %s27, 128
        %s288 = sshra.s32 %s287, 3
        %s289 = sand.u32 %s287, 7
        %s290 = smul.addr %s288, 4
        %s291 = scalar_lea.vmem %s264, %s290
        %v292 = vld [vmem:[%s291] sm:$0xf]
        %v293 = vld [vmem:[%s291 + $0x4] sm:$0xf]
        %v294 = vld [vmem:[%s291 + $0x8] sm:$0xf]
        %v295 = vld [vmem:[%s291 + $0xc] sm:$0xf]
        %v296 = vld [vmem:[%s291 + $0x10] sm:$0xf]
        %v297 = vld [vmem:[%s291 + $0x14] sm:$0xf]
        %v298 = vld [vmem:[%s291 + $0x18] sm:$0xf]
        %v299 = vld [vmem:[%s291 + $0x1c] sm:$0xf]
        %v300 = vld [vmem:[%s291 + $0x20] sm:$0xf]
        %v301 = vld [vmem:[%s291 + $0x24] sm:$0xf]
        %v302 = vld [vmem:[%s291 + $0x28] sm:$0xf]
        %v303 = vld [vmem:[%s291 + $0x2c] sm:$0xf]
        %v304 = vld [vmem:[%s291 + $0x30] sm:$0xf]
        %v305 = vld [vmem:[%s291 + $0x34] sm:$0xf]
        %v306 = vld [vmem:[%s291 + $0x38] sm:$0xf]
        %v307 = vld [vmem:[%s291 + $0x3c] sm:$0xf]
        %v308 = vld [vmem:[#allocation2] sm:$0xff]
        %v309 = vld [vmem:[#allocation2 + $0x8] sm:$0xff]
        %v310 = vld [vmem:[#allocation2 + $0x10] sm:$0xff]
        %v311 = vld [vmem:[#allocation2 + $0x18] sm:$0xff]
        %v312 = vld [vmem:[#allocation2 + $0x20] sm:$0xff]
        %v313 = vld [vmem:[#allocation2 + $0x28] sm:$0xff]
        %v314 = vld [vmem:[#allocation2 + $0x30] sm:$0xff]
        %v315 = vld [vmem:[#allocation2 + $0x38] sm:$0xff]
        %v316 = vld [vmem:[#allocation2 + $0x40] sm:$0xff]
        %v317 = vld [vmem:[#allocation2 + $0x48] sm:$0xff]
        %v318 = vld [vmem:[#allocation2 + $0x50] sm:$0xff]
        %v319 = vld [vmem:[#allocation2 + $0x58] sm:$0xff]
        %v320 = vld [vmem:[#allocation2 + $0x60] sm:$0xff]
        %v321 = vld [vmem:[#allocation2 + $0x68] sm:$0xff]
        %v322 = vld [vmem:[#allocation2 + $0x70] sm:$0xff]
        %v323 = vld [vmem:[#allocation2 + $0x78] sm:$0xff]
        %v324 = vld [vmem:[%s258] sm:$0xf]
        %v325 = vld [vmem:[%s258 + $0x4] sm:$0xf]
        %v326 = vld [vmem:[%s258 + $0x8] sm:$0xf]
        %v327 = vld [vmem:[%s258 + $0xc] sm:$0xf]
        %v328 = vld [vmem:[%s258 + $0x10] sm:$0xf]
        %v329 = vld [vmem:[%s258 + $0x14] sm:$0xf]
        %v330 = vld [vmem:[%s258 + $0x18] sm:$0xf]
        %v331 = vld [vmem:[%s258 + $0x1c] sm:$0xf]
        %v332 = vld [vmem:[%s258 + $0x20] sm:$0xf]
        %v333 = vld [vmem:[%s258 + $0x24] sm:$0xf]
        %v334 = vld [vmem:[%s258 + $0x28] sm:$0xf]
        %v335 = vld [vmem:[%s258 + $0x2c] sm:$0xf]
        %v336 = vld [vmem:[%s258 + $0x30] sm:$0xf]
        %v337 = vld [vmem:[%s258 + $0x34] sm:$0xf]
        %v338 = vld [vmem:[%s258 + $0x38] sm:$0xf]
        %v339 = vld [vmem:[%s258 + $0x3c] sm:$0xf]
        %v356 = vunpack.c.l.b16 %v324
        %v357 = vunpack.c.l.b16 %v325
        %v358 = vunpack.c.l.b16 %v326
        %v359 = vunpack.c.l.b16 %v327
        %v360 = vunpack.c.l.b16 %v328
        %v361 = vunpack.c.l.b16 %v329
        %v362 = vunpack.c.l.b16 %v330
        %v363 = vunpack.c.l.b16 %v331
        %v364 = vunpack.c.l.b16 %v332
        %v365 = vunpack.c.l.b16 %v333
        %v366 = vunpack.c.l.b16 %v334
        %v367 = vunpack.c.l.b16 %v335
        %v368 = vunpack.c.l.b16 %v336
        %v369 = vunpack.c.l.b16 %v337
        %v370 = vunpack.c.l.b16 %v338
        %v371 = vunpack.c.l.b16 %v339
        %v372 = vpack.c.b16 %v357, %v356
        %v373 = vpack.c.b16 %v359, %v358
        %v374 = vpack.c.b16 %v361, %v360
        %v375 = vpack.c.b16 %v363, %v362
        %v376 = vpack.c.b16 %v365, %v364
        %v377 = vpack.c.b16 %v367, %v366
        %v378 = vpack.c.b16 %v369, %v368
        %v379 = vpack.c.b16 %v371, %v370
        %v404 = vunpack.c.l.b16 %v292
        %v405 = vunpack.c.l.b16 %v293
        %v406 = vunpack.c.l.b16 %v294
        %v407 = vunpack.c.l.b16 %v295
        %v408 = vunpack.c.l.b16 %v296
        %v409 = vunpack.c.l.b16 %v297
        %v410 = vunpack.c.l.b16 %v298
        %v411 = vunpack.c.l.b16 %v299
        %v412 = vunpack.c.l.b16 %v300
        %v413 = vunpack.c.l.b16 %v301
        %v414 = vunpack.c.l.b16 %v302
        %v415 = vunpack.c.l.b16 %v303
        %v416 = vunpack.c.l.b16 %v304
        %v417 = vunpack.c.l.b16 %v305
        %v418 = vunpack.c.l.b16 %v306
        %v419 = vunpack.c.l.b16 %v307
        %v420 = vpack.c.b16 %v405, %v404
        %v421 = vpack.c.b16 %v407, %v406
        %v422 = vpack.c.b16 %v409, %v408
        %v423 = vpack.c.b16 %v411, %v410
        %v424 = vpack.c.b16 %v413, %v412
        %v425 = vpack.c.b16 %v415, %v414
        %v426 = vpack.c.b16 %v417, %v416
        %v427 = vpack.c.b16 %v419, %v418
        %436 = vmatprep.subr.bf16.mxu0 0
        %437 = vmatpush1.bf16.msra.mxu0 %v427
        %438 = vmatprep.subr.bf16.mxu0 0
        %439 = vmatpush1.bf16.msra.mxu0 %v426
        %440 = vmatprep.subr.bf16.mxu0 0
        %441 = vmatpush1.bf16.msra.mxu0 %v425
        %442 = vmatprep.subr.bf16.mxu0 0
        %443 = vmatpush1.bf16.msra.mxu0 %v424
        %444 = vmatprep.subr.bf16.mxu0 0
        %445 = vmatpush1.bf16.msra.mxu0 %v423
        %446 = vmatprep.subr.bf16.mxu0 0
        %447 = vmatpush1.bf16.msra.mxu0 %v422
        %448 = vmatprep.subr.bf16.mxu0 0
        %449 = vmatpush1.bf16.msra.mxu0 %v421
        %450 = vmatprep.subr.bf16.mxu0 0
        %451 = vmatpush1.bf16.msra.mxu0 %v420
        %452 = vmatprep.subr.bf16.mxu0 0
        %453 = vmatpush2.bf16.msra.mxu0 0
        %454 = vmatprep.subr.bf16.mxu0 0
        %455 = vmatpush2.bf16.msra.mxu0 0
        %456 = vmatprep.subr.bf16.mxu0 0
        %457 = vmatpush2.bf16.msra.mxu0 0
        %458 = vmatprep.subr.bf16.mxu0 0
        %459 = vmatpush2.bf16.msra.mxu0 0
        %460 = vmatprep.subr.bf16.mxu0 0
        %461 = vmatpush2.bf16.msra.mxu0 0
        %462 = vmatprep.subr.bf16.mxu0 0
        %463 = vmatpush2.bf16.msra.mxu0 0
        %464 = vmatprep.subr.bf16.mxu0 0
        %465 = vmatpush2.bf16.msra.mxu0 0
        %466 = vmatprep.subr.bf16.mxu0 0
        %467 = vmatpush2.bf16.msra.mxu0 0
        %468 = vmatprep.mubr.bf16.mxu0 0
        %469 = vmatmul.mubr.bf16.gmra.mxu0 %v372
        %v470 = vpop.f32.mrf.mxu0
        %v471 = vadd.f32 0.0, %v470
        %v472 = vpop.f32.mrf.mxu0
        %v473 = vpop.f32.mrf.mxu0
        %v474 = vadd.f32 0.0, %v473
        %v475 = vpop.f32.mrf.mxu0
        %476 = vmatprep.mubr.bf16.mxu0 0
        %477 = vmatmul.mubr.bf16.gmra.mxu0 %v373
        %v478 = vpop.f32.mrf.mxu0
        %v479 = vadd.f32 0.0, %v478
        %v480 = vpop.f32.mrf.mxu0
        %v481 = vpop.f32.mrf.mxu0
        %v482 = vadd.f32 0.0, %v481
        %v483 = vpop.f32.mrf.mxu0
        %484 = vmatprep.mubr.bf16.mxu0 0
        %485 = vmatmul.mubr.bf16.gmra.mxu0 %v374
        %v486 = vpop.f32.mrf.mxu0
        %v487 = vadd.f32 0.0, %v486
        %v488 = vpop.f32.mrf.mxu0
        %v489 = vpop.f32.mrf.mxu0
        %v490 = vadd.f32 0.0, %v489
        %v491 = vpop.f32.mrf.mxu0
        %492 = vmatprep.mubr.bf16.mxu0 0
        %493 = vmatmul.mubr.bf16.gmra.mxu0 %v375
        %v494 = vpop.f32.mrf.mxu0
        %v495 = vadd.f32 0.0, %v494
        %v496 = vpop.f32.mrf.mxu0
        %v497 = vpop.f32.mrf.mxu0
        %v498 = vadd.f32 0.0, %v497
        %v499 = vpop.f32.mrf.mxu0
        %500 = vmatprep.mubr.bf16.mxu0 0
        %501 = vmatmul.mubr.bf16.gmra.mxu0 %v376
        %v502 = vpop.f32.mrf.mxu0
        %v503 = vadd.f32 0.0, %v502
        %v504 = vpop.f32.mrf.mxu0
        %v505 = vpop.f32.mrf.mxu0
        %v506 = vadd.f32 0.0, %v505
        %v507 = vpop.f32.mrf.mxu0
        %508 = vmatprep.mubr.bf16.mxu0 0
        %509 = vmatmul.mubr.bf16.gmra.mxu0 %v377
        %v510 = vpop.f32.mrf.mxu0
        %v511 = vadd.f32 0.0, %v510
        %v512 = vpop.f32.mrf.mxu0
        %v513 = vpop.f32.mrf.mxu0
        %v514 = vadd.f32 0.0, %v513
        %v515 = vpop.f32.mrf.mxu0
        %516 = vmatprep.mubr.bf16.mxu0 0
        %517 = vmatmul.mubr.bf16.gmra.mxu0 %v378
        %v518 = vpop.f32.mrf.mxu0
        %v519 = vadd.f32 0.0, %v518
        %v520 = vpop.f32.mrf.mxu0
        %v521 = vpop.f32.mrf.mxu0
        %v522 = vadd.f32 0.0, %v521
        %v523 = vpop.f32.mrf.mxu0
        %524 = vmatprep.mubr.bf16.mxu0 0
        %525 = vmatmul.mubr.bf16.gmra.mxu0 %v379
        %v526 = vpop.f32.mrf.mxu0
        %v527 = vadd.f32 0.0, %v526
        %v528 = vpop.f32.mrf.mxu0
        %v529 = vpop.f32.mrf.mxu0
        %v530 = vadd.f32 0.0, %v529
        %v531 = vpop.f32.mrf.mxu0
        %532 = vdwg.mxu0
        %v533 = vadd.f32 %v308, %v471
        %v534 = vadd.f32 %v309, %v474
        %v535 = vadd.f32 %v310, %v479
        %v536 = vadd.f32 %v311, %v482
        %v537 = vadd.f32 %v312, %v487
        %v538 = vadd.f32 %v313, %v490
        %v539 = vadd.f32 %v314, %v495
        %v540 = vadd.f32 %v315, %v498
        %v541 = vadd.f32 %v316, %v503
        %v542 = vadd.f32 %v317, %v506
        %v543 = vadd.f32 %v318, %v511
        %v544 = vadd.f32 %v319, %v514
        %v545 = vadd.f32 %v320, %v519
        %v546 = vadd.f32 %v321, %v522
        %v547 = vadd.f32 %v322, %v527
        %v548 = vadd.f32 %v323, %v530
        %vm549 = vcmask 261120
        %550 = vst.msk [vmem:[#allocation2] sm:$0xff] %vm549, %v533
        %551 = vst.msk [vmem:[#allocation2 + $0x8] sm:$0xff] %vm549, %v534
        %552 = vst.msk [vmem:[#allocation2 + $0x10] sm:$0xff] %vm549, %v535
        %553 = vst.msk [vmem:[#allocation2 + $0x18] sm:$0xff] %vm549, %v536
        %554 = vst.msk [vmem:[#allocation2 + $0x20] sm:$0xff] %vm549, %v537
        %555 = vst.msk [vmem:[#allocation2 + $0x28] sm:$0xff] %vm549, %v538
        %556 = vst.msk [vmem:[#allocation2 + $0x30] sm:$0xff] %vm549, %v539
        %557 = vst.msk [vmem:[#allocation2 + $0x38] sm:$0xff] %vm549, %v540
        %558 = vst.msk [vmem:[#allocation2 + $0x40] sm:$0xff] %vm549, %v541
        %559 = vst.msk [vmem:[#allocation2 + $0x48] sm:$0xff] %vm549, %v542
        %560 = vst.msk [vmem:[#allocation2 + $0x50] sm:$0xff] %vm549, %v543
        %561 = vst.msk [vmem:[#allocation2 + $0x58] sm:$0xff] %vm549, %v544
        %562 = vst.msk [vmem:[#allocation2 + $0x60] sm:$0xff] %vm549, %v545
        %563 = vst.msk [vmem:[#allocation2 + $0x68] sm:$0xff] %vm549, %v546
        %564 = vst.msk [vmem:[#allocation2 + $0x70] sm:$0xff] %vm549, %v547
        %565 = vst.msk [vmem:[#allocation2 + $0x78] sm:$0xff] %vm549, %v548
        // Predicated region
        $region41: #{tpu_custom_call.1} parent=35 // pred_check
          %p566 = pneg %p266
        $region42: #{tpu_custom_call.1} parent=35 // pred_check_branch
          %568 = sbr.rel (%p566) target = $region44
        $region43: #{tpu_custom_call.1} parent=35 // pred_region
          %v569 = vld [vmem:[#allocation2] sm:$0xff]
          %v570 = vld [vmem:[#allocation2 + $0x8] sm:$0xff]
          %v571 = vld [vmem:[#allocation2 + $0x10] sm:$0xff]
          %v572 = vld [vmem:[#allocation2 + $0x18] sm:$0xff]
          %v573 = vld [vmem:[#allocation2 + $0x20] sm:$0xff]
          %v574 = vld [vmem:[#allocation2 + $0x28] sm:$0xff]
          %v575 = vld [vmem:[#allocation2 + $0x30] sm:$0xff]
          %v576 = vld [vmem:[#allocation2 + $0x38] sm:$0xff]
          %v577 = vld [vmem:[#allocation2 + $0x40] sm:$0xff]
          %v578 = vld [vmem:[#allocation2 + $0x48] sm:$0xff]
          %v579 = vld [vmem:[#allocation2 + $0x50] sm:$0xff]
          %v580 = vld [vmem:[#allocation2 + $0x58] sm:$0xff]
          %v581 = vld [vmem:[#allocation2 + $0x60] sm:$0xff]
          %v582 = vld [vmem:[#allocation2 + $0x68] sm:$0xff]
          %v583 = vld [vmem:[#allocation2 + $0x70] sm:$0xff]
          %v584 = vld [vmem:[#allocation2 + $0x78] sm:$0xff]
          %v585 = vtanh.pop %v569
          %v586 = vtanh.pop %v570
          %v587 = vtanh.pop %v571
          %v588 = vtanh.pop %v572
          %v589 = vtanh.pop %v573
          %v590 = vtanh.pop %v574
          %v591 = vtanh.pop %v575
          %v592 = vtanh.pop %v576
          %v593 = vtanh.pop %v577
          %v594 = vtanh.pop %v578
          %v595 = vtanh.pop %v579
          %v596 = vtanh.pop %v580
          %v597 = vtanh.pop %v581
          %v598 = vtanh.pop %v582
          %v599 = vtanh.pop %v583
          %v600 = vtanh.pop %v584
          %v601 = vld [vmem:[%s2] sm:$0x1]
          %v602 = vld [vmem:[#allocation3] sm:$0x1]
          %604 = vset.pattern.permute.xlu0 0
          %605 = vperm.xlu0 %604, %v602
          %v606 = vpop.permute.xlu0 %605
          %v608 = vlaneseq
          %v609 = vshrl.u32 %v608, 7
          %v610 = vsub.s32 0, %v609
          %v611 = vrot.slane %v606, %v610
          %v613 = vsel %vm549, %v601, 0
          %v616 = vsel %vm549, %v585, 0
          %v619 = vsel %vm549, %v586, 0
          %v622 = vsel %vm549, %v587, 0
          %v625 = vsel %vm549, %v588, 0
          %v628 = vsel %vm549, %v589, 0
          %v631 = vsel %vm549, %v590, 0
          %v634 = vsel %vm549, %v591, 0
          %v637 = vsel %vm549, %v592, 0
          %v640 = vsel %vm549, %v593, 0
          %v643 = vsel %vm549, %v594, 0
          %v646 = vsel %vm549, %v595, 0
          %v649 = vsel %vm549, %v596, 0
          %v652 = vsel %vm549, %v597, 0
          %v655 = vsel %vm549, %v598, 0
          %v658 = vsel %vm549, %v599, 0
          %v661 = vsel %vm549, %v600, 0
          %663 = vmatprep.subr.mxu0 0.0
          %664 = vmatpush1.xpose.msra.mxu0 %v661
          %665 = vmatprep.subr.mxu0 0.0
          %666 = vmatpush1.xpose.msra.mxu0 %v658
          %667 = vmatprep.subr.mxu0 0.0
          %668 = vmatpush1.xpose.msra.mxu0 %v655
          %669 = vmatprep.subr.mxu0 0.0
          %670 = vmatpush1.xpose.msra.mxu0 %v652
          %671 = vmatprep.subr.mxu0 0.0
          %672 = vmatpush1.xpose.msra.mxu0 %v649
          %673 = vmatprep.subr.mxu0 0.0
          %674 = vmatpush1.xpose.msra.mxu0 %v646
          %675 = vmatprep.subr.mxu0 0.0
          %676 = vmatpush1.xpose.msra.mxu0 %v643
          %677 = vmatprep.subr.mxu0 0.0
          %678 = vmatpush1.xpose.msra.mxu0 %v640
          %679 = vmatprep.subr.mxu0 0.0
          %680 = vmatpush1.xpose.msra.mxu0 %v637
          %681 = vmatprep.subr.mxu0 0.0
          %682 = vmatpush1.xpose.msra.mxu0 %v634
          %683 = vmatprep.subr.mxu0 0.0
          %684 = vmatpush1.xpose.msra.mxu0 %v631
          %685 = vmatprep.subr.mxu0 0.0
          %686 = vmatpush1.xpose.msra.mxu0 %v628
          %687 = vmatprep.subr.mxu0 0.0
          %688 = vmatpush1.xpose.msra.mxu0 %v625
          %689 = vmatprep.subr.mxu0 0.0
          %690 = vmatpush1.xpose.msra.mxu0 %v622
          %691 = vmatprep.subr.mxu0 0.0
          %692 = vmatpush1.xpose.msra.mxu0 %v619
          %693 = vmatprep.subr.mxu0 0.0
          %694 = vmatpush1.xpose.msra.mxu0 %v616
          %695 = vmatprep.subr.mxu0 0.0
          %696 = vmatpush2.xpose.msra.mxu0 0.0
          %697 = vmatprep.subr.mxu0 0.0
          %698 = vmatpush2.xpose.msra.mxu0 0.0
          %699 = vmatprep.subr.mxu0 0.0
          %700 = vmatpush2.xpose.msra.mxu0 0.0
          %701 = vmatprep.subr.mxu0 0.0
          %702 = vmatpush2.xpose.msra.mxu0 0.0
          %703 = vmatprep.subr.mxu0 0.0
          %704 = vmatpush2.xpose.msra.mxu0 0.0
          %705 = vmatprep.subr.mxu0 0.0
          %706 = vmatpush2.xpose.msra.mxu0 0.0
          %707 = vmatprep.subr.mxu0 0.0
          %708 = vmatpush2.xpose.msra.mxu0 0.0
          %709 = vmatprep.subr.mxu0 0.0
          %710 = vmatpush2.xpose.msra.mxu0 0.0
          %711 = vmatprep.subr.mxu0 0.0
          %712 = vmatpush2.xpose.msra.mxu0 0.0
          %713 = vmatprep.subr.mxu0 0.0
          %714 = vmatpush2.xpose.msra.mxu0 0.0
          %715 = vmatprep.subr.mxu0 0.0
          %716 = vmatpush2.xpose.msra.mxu0 0.0
          %717 = vmatprep.subr.mxu0 0.0
          %718 = vmatpush2.xpose.msra.mxu0 0.0
          %719 = vmatprep.subr.mxu0 0.0
          %720 = vmatpush2.xpose.msra.mxu0 0.0
          %721 = vmatprep.subr.mxu0 0.0
          %722 = vmatpush2.xpose.msra.mxu0 0.0
          %723 = vmatprep.subr.mxu0 0.0
          %724 = vmatpush2.xpose.msra.mxu0 0.0
          %725 = vmatprep.subr.mxu0 0.0
          %726 = vmatpush2.xpose.msra.mxu0 0.0
          %727 = vmatprep.mubr.f32.mxu0 0.0
          %728 = vmatmul.mubr.f32.gmra.mxu0 %v613
          %v729 = vpop.f32.mrf.mxu0
          %v730 = vadd.f32 %v611, %v729
          %v731 = vpop.f32.mrf.mxu0
          %732 = vdwg.mxu0
          %733 = vst [vmem:[%s246] sm:$0x1] %v730
        $region44: #{tpu_custom_call.1} parent=35 // pred_fallthru
          _
        %s734 = sand.u32 %s147, 1
        %s735 = scalar_lea.sflag [#allocation5], %s734
        %s736 = sand.u32 %s147, 1
        %s737 = scalar_lea.vmem [#allocation4], %s736
        // Predicated region
        $region45: #{tpu_custom_call.1} parent=35 // pred_check
          %p738 = pneg %p157
        $region46: #{tpu_custom_call.1} parent=35 // pred_check_branch
          %740 = sbr.rel (%p738) target = $region48
        $region47: #{tpu_custom_call.1} parent=35 // pred_region
          %s742 = ssub.s32 16, 16
          %743 = vsyncadd %s735, %s742
          %s744 = sadd.s32 %s26, %s25
          %s745 = smul.addr %s744, 16
          %s746 = scalar_lea.hbm %s4, %s745
          %s748 = sshll.u32 %s737, 4
          %s749 = int_to_ptr.vmem [resolvable:$true] %s748
          %751 = dma.vmem_to_hbm [thread:$0]  %s749, 16, %s746, %s735
        $region48: #{tpu_custom_call.1} parent=35 // pred_fallthru
          _
      $region36: #{tpu_custom_call.1} parent=5 // pred_fallthru
        _
      %p752 = scmp.le.s32.totalorder 2, %s15
      // Predicated region
      $region49: #{tpu_custom_call.1} parent=5 // pred_check
        %p753 = pneg %p752
      $region50: #{tpu_custom_call.1} parent=5 // pred_check_branch
        %755 = sbr.rel (%p753) target = $region52
      $region51: #{tpu_custom_call.1} parent=5 // pred_region
        %s756 = ssub.s32 %s15, 2
        // Predicated region
        $region53: #{tpu_custom_call.1} parent=51 // pred_check
          %p757 = pneg %p163
        $region54: #{tpu_custom_call.1} parent=51 // pred_check_branch
          %759 = sbr.rel (%p757) target = $region56
        $region55: #{tpu_custom_call.1} parent=51 // pred_region
          %s760 = sand.u32 %s148, 1
          %s761 = scalar_lea.sflag [#allocation5], %s760
          %s762 = sand.u32 %s148, 1
          %s763 = scalar_lea.vmem [#allocation4], %s762
          %764 = dma.done %s761, 16
        $region56: #{tpu_custom_call.1} parent=51 // pred_fallthru
          _
      $region52: #{tpu_custom_call.1} parent=5 // pred_fallthru
        _
    $region6: #{tpu_custom_call.1} parent=1 // loop_footer
      %s19 = sadd.s32 1, %s15
    $region7: #{tpu_custom_call.1} parent=1 // loop_footer_branch
      %14 = sbr.rel target = $region3
    $region8: #{tpu_custom_call.1} parent=1 // loop_exit
      _
    %765 = vsyncpa [#allocation5], 1
    %s766 = scalar_lea.sflag [#allocation5], 1
    %767 = vsyncpa %s766, 1

</llo_original>
